<compile_context>
chip_gen: v6e
topology: v6e:2x2x1
jax: 0.10.0
libtpu: 0.0.40
codegen_flags: <defaults>
</compile_context>

<pallas_src>
import functools

import jax
import jax.numpy as jnp
from jax import lax
from jax.experimental import pallas as pl
from jax.experimental.pallas import tpu as pltpu


# ----------------------------------------------------------------------------
# Helpers
# ----------------------------------------------------------------------------
def _pick_tile(dim, cap):
    """Largest tile <= cap that divides dim and keeps the sublane-8 rule."""
    if dim <= cap:
        return dim
    for t in range(cap - cap % 8, 7, -8):
        if dim % t == 0:
            return t
    # TODO(synk): no multiple-of-8 divisor <= cap (ragged sequence length);
    # fall back to the full axis (always layout-legal, but may need a larger
    # vmem_limit).  Proper ragged handling needs the kv_mask path.
    return dim


def _supports_bf16_vpu():
    """bf16 VPU/EUP exists on v6e / v7x; not on v5e.  Fail safe -> f32."""
    try:
        kind = jax.devices()[0].device_kind.lower()
    except Exception:
        return False
    return any(tag in kind for tag in ("v6", "v7", "7x"))


# ----------------------------------------------------------------------------
# Kernel 1: per-layer K/V projection (hoisted out of the attention stream).
#   K is written pre-transposed (C, S) so the attention QK^T needs no per-head
#   XLU relayout; both K^T and V are written in bf16 (halves the stream the
#   attention kernel re-reads n_l times).
# ----------------------------------------------------------------------------
def _kv_project_kernel(src_ref, wk_ref, wv_ref, kT_ref, v_ref):
    # src_ref: (1, TS, C) f32 ; wk/wv: (C, C) bf16 (pre-transposed: x @ W)
    srcb = src_ref[0].astype(jnp.bfloat16)                                    # (TS, C)
    k = jnp.dot(srcb, wk_ref[...], preferred_element_type=jnp.float32)        # (TS, C)
    v = jnp.dot(srcb, wv_ref[...], preferred_element_type=jnp.float32)        # (TS, C)
    kT_ref[0] = k.astype(jnp.bfloat16).T                                      # (C, TS)
    v_ref[0] = v.astype(jnp.bfloat16)                                         # (TS, C)


def kv_project(source, wk, wv, ts):
    N, S, C = source.shape
    n_s = S // ts
    return pl.pallas_call(
        _kv_project_kernel,
        out_shape=(jax.ShapeDtypeStruct((N, C, S), jnp.bfloat16),
                   jax.ShapeDtypeStruct((N, S, C), jnp.bfloat16)),
        grid=(N, n_s),
        in_specs=[
            pl.BlockSpec((1, ts, C), lambda n, si: (n, si, 0)),   # source
            pl.BlockSpec((C, C), lambda n, si: (0, 0)),           # wk
            pl.BlockSpec((C, C), lambda n, si: (0, 0)),           # wv
        ],
        out_specs=(
            pl.BlockSpec((1, C, ts), lambda n, si: (n, 0, si)),   # K^T
            pl.BlockSpec((1, ts, C), lambda n, si: (n, si, 0)),   # V
        ),
        compiler_params=pltpu.CompilerParams(
            dimension_semantics=("parallel", "parallel")),
    )(source, wk, wv)


# ----------------------------------------------------------------------------
# Kernel 2: flash-style attention over the streamed S axis + merge / LN1 /
# MLP / LN2 / residual fused at the last S step.
# Grid = (batch, L-tiles, S-tiles);  S is the "arbitrary" reduction axis.
# ----------------------------------------------------------------------------
def _attention_tail_kernel(x_ref, kT_ref, v_ref,
                           wq_ref, wm_ref, w1a_ref, w1b_ref, w2_ref,
                           g1_ref, b1_ref, g2_ref, b2_ref,
                           out_ref,
                           q_scr, m_scr, l_scr, acc_scr,
                           *, nhead, head_dim, bf16_probs):
    # x_ref: (1, TL, C) f32 (resident across S) ; kT_ref: (1, C, TS) bf16
    # v_ref: (1, TS, C) bf16 ; weights bf16 ; LN affines f32.
    # scratch: q_scr (TL, C) bf16 ; m/l_scr (TL, H) f32 ; acc_scr (TL, C) f32.
    si = pl.program_id(2)
    n_s = pl.num_programs(2)
    TL = q_scr.shape[0]
    D = head_dim

    # ---- init (first S tile of this (batch, L-tile)): project Q once,
    # zero the online-softmax state.  (1/sqrt(D) is pre-folded into Wq.)
    @pl.when(si == 0)
    def _():
        xb = x_ref[0].astype(jnp.bfloat16)                                    # (TL, C)
        q_scr[...] = jnp.dot(xb, wq_ref[...],
                             preferred_element_type=jnp.float32
                             ).astype(jnp.bfloat16)
        m_scr[...] = jnp.full(m_scr.shape, -jnp.inf, dtype=m_scr.dtype)
        l_scr[...] = jnp.zeros(l_scr.shape, dtype=l_scr.dtype)
        acc_scr[...] = jnp.zeros(acc_scr.shape, dtype=acc_scr.dtype)

    m_prev = m_scr[...]                                                       # (TL, H)
    l_prev = l_scr[...]                                                       # (TL, H)

    # ---- per-head online softmax; results kept in registers, scratch written
    # once per S step with lane-dense stores (no per-head masked vst).
    # TODO(synk): q_mask / kv_mask masked_fill(-inf) path not implemented
    # (module is run with mask=None).
    m_parts, l_parts, a_parts, pv_parts = [], [], [], []
    for h in range(nhead):
        cols = slice(h * D, (h + 1) * D)
        qh = q_scr[:, cols]                                                   # (TL, D) bf16
        khT = kT_ref[0, cols, :]                                              # (D, TS) bf16
        vh = v_ref[0, :, cols]                                                # (TS, D) bf16

        s = jnp.dot(qh, khT, preferred_element_type=jnp.float32)              # (TL, TS) f32
        m_old = m_prev[:, h:h + 1]                                            # (TL, 1)
        m_new = jnp.maximum(m_old, jnp.max(s, axis=-1, keepdims=True))
        a = jnp.exp(m_old - m_new)                                            # (TL, 1) f32

        if bf16_probs:
            # v6e / v7x: bf16 EUP/VPU -> halves exp cost & temp footprint.
            p = jnp.exp((s - m_new).astype(jnp.bfloat16))                     # (TL, TS) bf16
            row_sum = jnp.sum(p.astype(jnp.float32), axis=-1, keepdims=True)
            pv = jnp.dot(p, vh, preferred_element_type=jnp.float32)           # (TL, D) f32
        else:
            # v5e: no bf16 VPU/EUP -> keep probs in f32.
            p = jnp.exp(s - m_new)
            row_sum = jnp.sum(p, axis=-1, keepdims=True)
            pv = jnp.dot(p.astype(jnp.bfloat16), vh,
                         preferred_element_type=jnp.float32)

        m_parts.append(m_new)
        l_parts.append(a * l_prev[:, h:h + 1] + row_sum)
        a_parts.append(jnp.broadcast_to(a, (TL, D)))
        pv_parts.append(pv)

    a_full = jnp.concatenate(a_parts, axis=-1)                                # (TL, C)
    pv_full = jnp.concatenate(pv_parts, axis=-1)                              # (TL, C)
    acc_scr[...] = a_full * acc_scr[...] + pv_full                            # 1 lane-dense RMW / step
    m_scr[...] = jnp.concatenate(m_parts, axis=-1)                            # 1 (TL, H) store / step
    l_scr[...] = jnp.concatenate(l_parts, axis=-1)

    # ---- finalize (last S tile): normalize, merge, LN1, MLP, LN2, residual.
    @pl.when(si == n_s - 1)
    def _():
        inv_l = 1.0 / l_scr[...]                                              # exact; (TL, H) only
        inv_full = jnp.concatenate(
            [jnp.broadcast_to(inv_l[:, h:h + 1], (TL, D)) for h in range(nhead)],
            axis=-1)                                                          # (TL, C)
        packed = (acc_scr[...] * inv_full).astype(jnp.bfloat16)               # concat_h(head_h)

        # merge(concat(heads)) as one lane-dense (C, C) matmul.
        merged = jnp.dot(packed, wm_ref[...], preferred_element_type=jnp.float32)

        # LayerNorm 1 (f32)
        mu1 = jnp.mean(merged, axis=-1, keepdims=True)
        var1 = jnp.mean((merged - mu1) ** 2, axis=-1, keepdims=True)
        msg = (merged - mu1) * lax.rsqrt(var1 + 1e-5)
        msg = msg * g1_ref[0] + b1_ref[0]

        # MLP on concat([x, msg]) without an explicit concat:
        #   concat([x, msg]) @ W1^T == x @ W1a + msg @ W1b
        xb = x_ref[0].astype(jnp.bfloat16)
        hid = jnp.dot(xb, w1a_ref[...], preferred_element_type=jnp.float32) \
            + jnp.dot(msg.astype(jnp.bfloat16), w1b_ref[...],
                      preferred_element_type=jnp.float32)                     # (TL, 2C)
        hid = jnp.maximum(hid, 0.0)                                           # ReLU
        m2 = jnp.dot(hid.astype(jnp.bfloat16), w2_ref[...],
                     preferred_element_type=jnp.float32)                      # (TL, C)

        # LayerNorm 2 (f32)
        mu2 = jnp.mean(m2, axis=-1, keepdims=True)
        var2 = jnp.mean((m2 - mu2) ** 2, axis=-1, keepdims=True)
        m2 = (m2 - mu2) * lax.rsqrt(var2 + 1e-5)
        m2 = m2 * g2_ref[0] + b2_ref[0]

        # Residual add in f32.
        out_ref[0] = (x_ref[0].astype(jnp.float32) + m2).astype(out_ref.dtype)


# ----------------------------------------------------------------------------
# Host-side wrapper (one LoFTREncoderLayer.forward).
# ----------------------------------------------------------------------------
def encoder_layer(x, source, params, nhead, *, tl_cap=256, ts_cap=1024,
                  bf16_probs=None):
    N, L, C = x.shape
    S = source.shape[1]
    D = C // nhead
    TL = _pick_tile(L, tl_cap)
    TS = _pick_tile(S, ts_cap)
    n_l, n_s = L // TL, S // TS

    if bf16_probs is None:
        bf16_probs = _supports_bf16_vpu()

    # Hoisted K/V projection: done once per layer (bf16, K pre-transposed),
    # instead of once per L-tile inside the attention stream.
    kT, v = kv_project(source, params["wk"], params["wv"], TS)

    kernel = functools.partial(_attention_tail_kernel, nhead=nhead,
                               head_dim=D, bf16_probs=bf16_probs)

    def wspec(shape):
        zeros = (0,) * len(shape)
        return pl.BlockSpec(shape, lambda n, li, si, _z=zeros: _z)

    # Note: weight specs have constant index maps so they are fetched once;
    # pl.Buffered(1) on them would reclaim ~1.3 MiB of double-buffering but is
    # left off here for maximum lowering compatibility.
    return pl.pallas_call(
        kernel,
        out_shape=jax.ShapeDtypeStruct((N, L, C), x.dtype),
        grid=(N, n_l, n_s),
        in_specs=[
            pl.BlockSpec((1, TL, C), lambda n, li, si: (n, li, 0)),   # x (resident over S)
            pl.BlockSpec((1, C, TS), lambda n, li, si: (n, 0, si)),   # K^T bf16 stream
            pl.BlockSpec((1, TS, C), lambda n, li, si: (n, si, 0)),   # V   bf16 stream
            wspec((C, C)),                                            # wq (scaled)
            wspec((C, C)),                                            # wm (merge)
            wspec((C, 2 * C)),                                        # w1a (mlp[0], x part)
            wspec((C, 2 * C)),                                        # w1b (mlp[0], msg part)
            wspec((2 * C, C)),                                        # w2  (mlp[2])
            wspec((1, C)), wspec((1, C)),                             # LN1 gamma, beta
            wspec((1, C)), wspec((1, C)),                             # LN2 gamma, beta
        ],
        out_specs=pl.BlockSpec((1, TL, C), lambda n, li, si: (n, li, 0)),
        scratch_shapes=[
            pltpu.VMEM((TL, C), jnp.bfloat16),       # Q projection (persists over S)
            pltpu.VMEM((TL, nhead), jnp.float32),    # running max per head
            pltpu.VMEM((TL, nhead), jnp.float32),    # running sum per head
            pltpu.VMEM((TL, C), jnp.float32),        # output accumulator (head-packed)
        ],
        compiler_params=pltpu.CompilerParams(
            dimension_semantics=("parallel", "parallel", "arbitrary"),
            # Raised scoped-VMEM limit so the larger TL/TS tiles also fit on
            # v5e's 16 MiB default; 48 MiB is still < v7x's 64 MiB physical.
            vmem_limit_bytes=48 * 1024 * 1024),
    )(x, kT, v,
      params["wq"], params["wm"], params["w1a"], params["w1b"], params["w2"],
      params["g1"], params["b1"], params["g2"], params["b2"])


# ----------------------------------------------------------------------------
# LocalFeatureTransformer-style loop over layers (Python level).
# ----------------------------------------------------------------------------
def local_feature_transformer(feat0, feat1, layer_params, layer_names, nhead):
    i, n_layers = 0, len(layer_names)
    while i < n_layers:
        name = layer_names[i]
        if name == "self":
            if feat0.shape == feat1.shape:
                # One batched call (shared weights); stay stacked across any
                # run of consecutive 'self' layers (no concat/split per layer).
                stacked = jnp.concatenate([feat0, feat1], axis=0)
                while i < n_layers and layer_names[i] == "self":
                    stacked = encoder_layer(stacked, stacked, layer_params[i], nhead)
                    i += 1
                n = feat0.shape[0]
                feat0, feat1 = stacked[:n], stacked[n:]
            else:
                feat0 = encoder_layer(feat0, feat0, layer_params[i], nhead)
                feat1 = encoder_layer(feat1, feat1, layer_params[i], nhead)
                i += 1
        elif name == "cross":
            feat0 = encoder_layer(feat0, feat1, layer_params[i], nhead)
            feat1 = encoder_layer(feat1, feat0, layer_params[i], nhead)  # uses updated feat0
            i += 1
        else:
            raise KeyError(name)
    return feat0, feat1


# ----------------------------------------------------------------------------
# Deterministic parameter init (xavier_uniform on 2-D weights, as in module).
# ----------------------------------------------------------------------------
def _xavier_uniform(key, out_f, in_f):
    # PyTorch Linear weight is (out, in); xavier bound uses fan_in + fan_out.
    bound = (6.0 / (in_f + out_f)) ** 0.5
    return jax.random.uniform(key, (out_f, in_f), jnp.float32, -bound, bound)


def init_layer_params(key, d_model, nhead):
    C = d_model
    D = C // nhead
    ks = jax.random.split(key, 6)
    wq = _xavier_uniform(ks[0], C, C)          # (out, in)
    wk = _xavier_uniform(ks[1], C, C)
    wv = _xavier_uniform(ks[2], C, C)
    wm = _xavier_uniform(ks[3], C, C)
    w1 = _xavier_uniform(ks[4], 2 * C, 2 * C)  # mlp[0]
    w2 = _xavier_uniform(ks[5], C, 2 * C)      # mlp[2]

    softmax_temp = 1.0 / (D ** 0.5)            # folded into Wq (one-time, host)

    return dict(
        wq=(wq.T * softmax_temp).astype(jnp.bfloat16),   # (C, C)
        wk=wk.T.astype(jnp.bfloat16),                    # (C, C)
        wv=wv.T.astype(jnp.bfloat16),                    # (C, C)
        wm=wm.T.astype(jnp.bfloat16),                    # (C, C)
        w1a=w1.T[:C, :].astype(jnp.bfloat16),            # (C, 2C)  x part
        w1b=w1.T[C:, :].astype(jnp.bfloat16),            # (C, 2C)  msg part
        w2=w2.T.astype(jnp.bfloat16),                    # (2C, C)
        g1=jnp.ones((1, C), jnp.float32),                # LayerNorm affines (f32)
        b1=jnp.zeros((1, C), jnp.float32),
        g2=jnp.ones((1, C), jnp.float32),
        b2=jnp.zeros((1, C), jnp.float32),
    )


if __name__ == "__main__":
    # Small config consistent with the module: d_model=32, nhead=4,
    # layer_names=['self', 'cross'], batch=2, L=S=16 tokens.
    # (Production LoFTR uses C=256, L=S~4800, which is what the tiling targets.)
    N, L, S, C, nhead = 2, 16, 16, 32, 4
    layer_names = ["self", "cross"]

    key = jax.random.PRNGKey(0)
    k0, k1, kp = jax.random.split(key, 3)
    feat0 = jax.random.normal(k0, (N, L, C), jnp.float32)
    feat1 = jax.random.normal(k1, (N, S, C), jnp.float32)

    layer_params = [init_layer_params(k, C, nhead)
                    for k in jax.random.split(kp, len(layer_names))]

    out0, out1 = local_feature_transformer(feat0, feat1, layer_params,
                                           layer_names, nhead)
    out0, out1 = jax.block_until_ready((out0, out1))

    assert out0.shape == (N, L, C) and out1.shape == (N, S, C)
    assert bool(jnp.all(jnp.isfinite(out0))) and bool(jnp.all(jnp.isfinite(out1)))
    print("KERNEL_OK")
</pallas_src>

<mosaic_0001>
module attributes {stable_mosaic.version = 11 : i64} {
  func.func @_kv_project_kernel(%arg0: i32, %arg1: i32, %arg2: memref<1x16x32xf32, #tpu.memory_space<vmem>>, %arg3: memref<32x32xbf16, #tpu.memory_space<vmem>>, %arg4: memref<32x32xbf16, #tpu.memory_space<vmem>>, %arg5: memref<1x32x16xbf16, #tpu.memory_space<vmem>>, %arg6: memref<1x16x32xbf16, #tpu.memory_space<vmem>>) attributes {dimension_semantics = [#tpu.dimension_semantics<parallel>, #tpu.dimension_semantics<parallel>], iteration_bounds = array<i64: 4, 1>, scalar_prefetch = 0 : i64, scratch_operands = 0 : i64, tpu.core_type = #tpu.core_type<tc>, window_params = [{transform_indices = @transform_0, window_bounds = array<i64: 1, 16, 32>}, {pipeline_mode = #tpu.pipeline_mode<synchronous>, transform_indices = @transform_1, window_bounds = array<i64: 32, 32>}, {pipeline_mode = #tpu.pipeline_mode<synchronous>, transform_indices = @transform_2, window_bounds = array<i64: 32, 32>}, {transform_indices = @transform_3, window_bounds = array<i64: 1, 32, 16>}, {transform_indices = @transform_4, window_bounds = array<i64: 1, 16, 32>}]} {
    %c0 = arith.constant 0 : index
    %c0_0 = arith.constant 0 : index
    %c0_1 = arith.constant 0 : index
    %0 = vector.load %arg2[%c0, %c0_0, %c0_1] : memref<1x16x32xf32, #tpu.memory_space<vmem>>, vector<1x16x32xf32>
    %1 = vector.shape_cast %0 : vector<1x16x32xf32> to vector<16x32xf32>
    %2 = arith.truncf %1 : vector<16x32xf32> to vector<16x32xbf16>
    %c0_2 = arith.constant 0 : index
    %c0_3 = arith.constant 0 : index
    %3 = vector.load %arg3[%c0_2, %c0_3] : memref<32x32xbf16, #tpu.memory_space<vmem>>, vector<32x32xbf16>
    %cst = arith.constant dense<0.000000e+00> : vector<16x32xf32>
    %4 = tpu.matmul %2, %3, %cst {dimension_numbers = #tpu.dot_dimension_numbers<[1], [0], [0], [1], [0, 0, 1, 1], [], []>} : vector<16x32xbf16>, vector<32x32xbf16>, vector<16x32xf32> -> vector<16x32xf32>
    %c0_4 = arith.constant 0 : index
    %c0_5 = arith.constant 0 : index
    %5 = vector.load %arg4[%c0_4, %c0_5] : memref<32x32xbf16, #tpu.memory_space<vmem>>, vector<32x32xbf16>
    %cst_6 = arith.constant dense<0.000000e+00> : vector<16x32xf32>
    %6 = tpu.matmul %2, %5, %cst_6 {dimension_numbers = #tpu.dot_dimension_numbers<[1], [0], [0], [1], [0, 0, 1, 1], [], []>} : vector<16x32xbf16>, vector<32x32xbf16>, vector<16x32xf32> -> vector<16x32xf32>
    %7 = arith.truncf %4 : vector<16x32xf32> to vector<16x32xbf16>
    %8 = tpu.transpose %7, [1, 0] : vector<16x32xbf16> -> vector<32x16xbf16>
    %c0_7 = arith.constant 0 : index
    %c0_8 = arith.constant 0 : index
    %c0_9 = arith.constant 0 : index
    %9 = vector.load %arg5[%c0_7, %c0_8, %c0_9] : memref<1x32x16xbf16, #tpu.memory_space<vmem>>, vector<1x32x16xbf16>
    %10 = vector.shape_cast %9 : vector<1x32x16xbf16> to vector<32x16xbf16>
    %11 = vector.shape_cast %8 : vector<32x16xbf16> to vector<1x32x16xbf16>
    tpu.vector_store %arg5[%c0_7, %c0_8, %c0_9], %11 {strides = array<i32>} : memref<1x32x16xbf16, #tpu.memory_space<vmem>>, vector<1x32x16xbf16>,
    %12 = arith.truncf %6 : vector<16x32xf32> to vector<16x32xbf16>
    %c0_10 = arith.constant 0 : index
    %c0_11 = arith.constant 0 : index
    %c0_12 = arith.constant 0 : index
    %13 = vector.load %arg6[%c0_10, %c0_11, %c0_12] : memref<1x16x32xbf16, #tpu.memory_space<vmem>>, vector<1x16x32xbf16>
    %14 = vector.shape_cast %13 : vector<1x16x32xbf16> to vector<16x32xbf16>
    %15 = vector.shape_cast %12 : vector<16x32xbf16> to vector<1x16x32xbf16>
    tpu.vector_store %arg6[%c0_10, %c0_11, %c0_12], %15 {strides = array<i32>} : memref<1x16x32xbf16, #tpu.memory_space<vmem>>, vector<1x16x32xbf16>,
    return
  }
  func.func @transform_0(%arg0: i32, %arg1: i32) -> (i32, i32, i32) {
    %c0_i32 = arith.constant 0 : i32
    %c0_i32_0 = arith.constant 0 : i32
    return %arg0, %arg1, %c0_i32 : i32, i32, i32
  }
  func.func @transform_1(%arg0: i32, %arg1: i32) -> (i32, i32) {
    %c0_i32 = arith.constant 0 : i32
    %c0_i32_0 = arith.constant 0 : i32
    %c0_i32_1 = arith.constant 0 : i32
    return %c0_i32, %c0_i32_0 : i32, i32
  }
  func.func @transform_2(%arg0: i32, %arg1: i32) -> (i32, i32) {
    %c0_i32 = arith.constant 0 : i32
    %c0_i32_0 = arith.constant 0 : i32
    %c0_i32_1 = arith.constant 0 : i32
    return %c0_i32, %c0_i32_0 : i32, i32
  }
  func.func @transform_3(%arg0: i32, %arg1: i32) -> (i32, i32, i32) {
    %c0_i32 = arith.constant 0 : i32
    %c0_i32_0 = arith.constant 0 : i32
    return %arg0, %c0_i32, %arg1 : i32, i32, i32
  }
  func.func @transform_4(%arg0: i32, %arg1: i32) -> (i32, i32, i32) {
    %c0_i32 = arith.constant 0 : i32
    %c0_i32_0 = arith.constant 0 : i32
    return %arg0, %arg1, %c0_i32 : i32, i32, i32
  }
}

</mosaic_0001>

<llo_original>
// kernel: tpu_custom_call.1
$region0: #{tpu_custom_call.1}
  #allocation0 [shape = 'u32[]', space=smem, size = 0x4, offset = 0x4, fixed_abs, tag = 'smem constant byte address 0x4 - core index']
  #allocation1 [shape = 'u32[144,128]{1,0:T(1,128)}', space=vmem, size = 0x12000, scoped, tag = 'internal scratch']
  %s0 = inlined_call_operand.hbm [shape: f32[4,16,32], index: 0, kind: input, shape index: {}]
  %s1 = inlined_call_operand.hbm [shape: bf16[32,32], index: 1, kind: input, shape index: {}]
  %s2 = inlined_call_operand.hbm [shape: bf16[32,32], index: 2, kind: input, shape index: {}]
  %s3 = inlined_call_operand.vmem [shape: bf16[4,32,16], index: 3, kind: output, shape index: {0}]
  %s4 = inlined_call_operand.hbm [shape: bf16[4,16,32], index: 4, kind: output, shape index: {1}]
  %5 = xla_tuple %s3, %s4
  %s6 = sld [smem:[#allocation0]]
  $region65: #{tpu_custom_call.1} parent=0
    _
  %s8 = ssub.s32 1, %s6
  %s9 = scalar_select 0, %s8, %s6
  $region1: #{tpu_custom_call.1} parent=0
    #allocation2 [shape = 'u8[16384]{0}', space=vmem, size = 0x4000, scoped, tag = 'input window, operand 0']
    #allocation3 [shape = 's32[2]{0}', space=sflag, size = 0x8, scoped, tag = 'scoped memory for tpu_custom_call.1']
    #allocation4 [shape = 's32[2]{0}', space=sflag, size = 0x8, scoped, tag = 'scoped memory for tpu_custom_call.1']
    #allocation5 [shape = 'u8[8192]{0}', space=vmem, size = 0x2000, scoped, tag = 'input window, operand 1, single buffered']
    #allocation6 [shape = 's32[1]{0}', space=sflag, size = 0x4, scoped, tag = 'scoped memory for tpu_custom_call.1']
    #allocation7 [shape = 'u8[8192]{0}', space=vmem, size = 0x2000, scoped, tag = 'input window, operand 2, single buffered']
    #allocation8 [shape = 'u8[8192]{0}', space=vmem, size = 0x2000, scoped, tag = 'output window, operand 1']
    %10 = vsyncpa [#allocation3], 0
    %s11 = scalar_lea.sflag [#allocation3], 1
    %12 = vsyncpa %s11, 0
    %13 = vsyncpa [#allocation6], 0
    %14 = vsyncpa [#allocation4], 0
    %s15 = scalar_lea.sflag [#allocation4], 1
    %16 = vsyncpa %s15, 0
    loop: start=0, step=1, limit=6
    $region2: #{tpu_custom_call.1} parent=1 // loop_pre_header
      _
    $region3: #{tpu_custom_call.1} parent=1 // loop_header
      %s18 = sphi 0, %s22
      %p19 = scmp.ge.s32.totalorder %s18, 6
      %s25 = sphi 0, %s37
      %s26 = sphi 0, %s33
      %s27 = sphi 0, %s25
      %s28 = sphi 0, %s26
      %s29 = sphi 0, %s27
      %s30 = sphi 0, %s28
      %s42 = sphi 0, %s44
      %s45 = sphi 0, %s42
      %s46 = sphi 0, %s45
      %s62 = sphi 0, %s46
      %s66 = sphi 0, %s66
      %s68 = sphi 0, %s66
      %s69 = sphi 0, %s68
      %s83 = sphi 0, %s69
      %s87 = sphi 0, %s87
      %s89 = sphi 0, %s87
      %s90 = sphi 0, %s89
      %s104 = sphi 0, %s90
      %s112 = sphi 0, %s114
      %s115 = sphi 0, %s112
      %s116 = sphi 0, %s115
      %s132 = sphi 0, %s116
      %s140 = sphi 0, %s142
      %s143 = sphi 0, %s140
      %s144 = sphi 0, %s143
      %s160 = sphi 0, %s144
    $region4: #{tpu_custom_call.1} parent=1 // loop_header_branch
      %21 = sbr.rel (%p19) target = $region8
    $region5: #{tpu_custom_call.1} parent=1 // loop_body
      %s23 = ssub.s32 %s18, 1
      %s24 = ssub.s32 %s18, 2
      %s31 = sadd.s32 1, %s26
      %p32 = scmp.ge.s32.totalorder %s31, 1
      %s33 = scalar_select %p32, 0, %s31
      %s34 = sadd.s32 1, %s25
      %s35 = scalar_select %p32, %s34, %s25
      %p36 = scmp.ge.s32.totalorder %s35, 4
      %s37 = scalar_select %p36, 0, %s35
      %s38 = ssub.s32 %s25, %s37
      %s39 = ssub.s32 %s26, %s33
      %s40 = sor.u32 %s38, %s39
      %p41 = scmp.eq.s32.totalorder %s40, 0
      %s43 = sadd.s32 %s42, 1
      %s44 = scalar_select %p41, %s42, %s43
      %p47 = pneg %p41
      %p48 = scmp.eq.s32.totalorder %s18, 3
      %p49 = por %p47, %p48
      %p50 = scmp.ne.s32.totalorder %s42, %s45
      %p51 = scmp.eq.s32.totalorder %s18, 0
      %p52 = por %p50, %p51
      %p53 = scmp.ne.s32.totalorder %s42, %s45
      %p54 = scmp.eq.s32.totalorder %s23, 3
      %p55 = por %p53, %p54
      %p56 = scmp.ne.s32.totalorder %s45, %s46
      %p57 = scmp.eq.s32.totalorder %s23, 0
      %p58 = por %p56, %p57
      %p59 = scmp.ne.s32.totalorder %s45, %s46
      %p60 = scmp.eq.s32.totalorder %s24, 3
      %p61 = por %p59, %p60
      %p63 = scmp.ne.s32.totalorder %s46, %s62
      %p64 = scmp.eq.s32.totalorder %s24, 0
      %p65 = por %p63, %p64
      %s67 = sadd.s32 %s66, 1
      %p70 = scmp.eq.s32.totalorder %s18, 3
      %p71 = scmp.ne.s32.totalorder %s66, %s68
      %p72 = scmp.eq.s32.totalorder %s18, 0
      %p73 = por %p71, %p72
      %p74 = scmp.ne.s32.totalorder %s66, %s68
      %p75 = scmp.eq.s32.totalorder %s23, 3
      %p76 = por %p74, %p75
      %p77 = scmp.ne.s32.totalorder %s68, %s69
      %p78 = scmp.eq.s32.totalorder %s23, 0
      %p79 = por %p77, %p78
      %p80 = scmp.ne.s32.totalorder %s68, %s69
      %p81 = scmp.eq.s32.totalorder %s24, 3
      %p82 = por %p80, %p81
      %p84 = scmp.ne.s32.totalorder %s69, %s83
      %p85 = scmp.eq.s32.totalorder %s24, 0
      %p86 = por %p84, %p85
      %s88 = sadd.s32 %s87, 1
      %p91 = scmp.eq.s32.totalorder %s18, 3
      %p92 = scmp.ne.s32.totalorder %s87, %s89
      %p93 = scmp.eq.s32.totalorder %s18, 0
      %p94 = por %p92, %p93
      %p95 = scmp.ne.s32.totalorder %s87, %s89
      %p96 = scmp.eq.s32.totalorder %s23, 3
      %p97 = por %p95, %p96
      %p98 = scmp.ne.s32.totalorder %s89, %s90
      %p99 = scmp.eq.s32.totalorder %s23, 0
      %p100 = por %p98, %p99
      %p101 = scmp.ne.s32.totalorder %s89, %s90
      %p102 = scmp.eq.s32.totalorder %s24, 3
      %p103 = por %p101, %p102
      %p105 = scmp.ne.s32.totalorder %s90, %s104
      %p106 = scmp.eq.s32.totalorder %s24, 0
      %p107 = por %p105, %p106
      %s108 = ssub.s32 %s25, %s37
      %s109 = ssub.s32 %s26, %s33
      %s110 = sor.u32 %s108, %s109
      %p111 = scmp.eq.s32.totalorder %s110, 0
      %s113 = sadd.s32 %s112, 1
      %s114 = scalar_select %p111, %s112, %s113
      %p117 = pneg %p111
      %p118 = scmp.eq.s32.totalorder %s18, 3
      %p119 = por %p117, %p118
      %p120 = scmp.ne.s32.totalorder %s112, %s115
      %p121 = scmp.eq.s32.totalorder %s18, 0
      %p122 = por %p120, %p121
      %p123 = scmp.ne.s32.totalorder %s112, %s115
      %p124 = scmp.eq.s32.totalorder %s23, 3
      %p125 = por %p123, %p124
      %p126 = scmp.ne.s32.totalorder %s115, %s116
      %p127 = scmp.eq.s32.totalorder %s23, 0
      %p128 = por %p126, %p127
      %p129 = scmp.ne.s32.totalorder %s115, %s116
      %p130 = scmp.eq.s32.totalorder %s24, 3
      %p131 = por %p129, %p130
      %p133 = scmp.ne.s32.totalorder %s116, %s132
      %p134 = scmp.eq.s32.totalorder %s24, 0
      %p135 = por %p133, %p134
      %s136 = ssub.s32 %s25, %s37
      %s137 = ssub.s32 %s26, %s33
      %s138 = sor.u32 %s136, %s137
      %p139 = scmp.eq.s32.totalorder %s138, 0
      %s141 = sadd.s32 %s140, 1
      %s142 = scalar_select %p139, %s140, %s141
      %p145 = pneg %p139
      %p146 = scmp.eq.s32.totalorder %s18, 3
      %p147 = por %p145, %p146
      %p148 = scmp.ne.s32.totalorder %s140, %s143
      %p149 = scmp.eq.s32.totalorder %s18, 0
      %p150 = por %p148, %p149
      %p151 = scmp.ne.s32.totalorder %s140, %s143
      %p152 = scmp.eq.s32.totalorder %s23, 3
      %p153 = por %p151, %p152
      %p154 = scmp.ne.s32.totalorder %s143, %s144
      %p155 = scmp.eq.s32.totalorder %s23, 0
      %p156 = por %p154, %p155
      %p157 = scmp.ne.s32.totalorder %s143, %s144
      %p158 = scmp.eq.s32.totalorder %s24, 3
      %p159 = por %p157, %p158
      %p161 = scmp.ne.s32.totalorder %s144, %s160
      %p162 = scmp.eq.s32.totalorder %s24, 0
      %p163 = por %p161, %p162
      %p164 = scmp.le.s32.totalorder 1, %s18
      %p165 = scmp.lt.s32.totalorder %s18, 5
      %p166 = pnand %p164, %p165
      %p167 = pneg %p166
      // Predicated region
      $region9: #{tpu_custom_call.1} parent=5 // pred_check
        _
      $region10: #{tpu_custom_call.1} parent=5 // pred_check_branch
        %169 = sbr.rel (%p166) target = $region12
      $region11: #{tpu_custom_call.1} parent=5 // pred_region
        %s170 = ssub.s32 %s18, 1
        // Predicated region
        $region13: #{tpu_custom_call.1} parent=11 // pred_check
          %p171 = pneg %p79
        $region14: #{tpu_custom_call.1} parent=11 // pred_check_branch
          %173 = sbr.rel (%p171) target = $region16
        $region15: #{tpu_custom_call.1} parent=11 // pred_region
          %s175 = ssub.s32 256, 256
          %176 = vsyncadd [#allocation6], %s175
          %s177 = sshll.u32 [#allocation5], 4
          %s178 = int_to_ptr.vmem [resolvable:$true] %s177
          %183 = dma.hbm_to_vmem [thread:$0]  %s1, 256, %s178, [#allocation6], 64, 64, 4
        $region16: #{tpu_custom_call.1} parent=11 // pred_fallthru
          _
        // Predicated region
        $region17: #{tpu_custom_call.1} parent=11 // pred_check
          %p184 = pneg %p100
        $region18: #{tpu_custom_call.1} parent=11 // pred_check_branch
          %186 = sbr.rel (%p184) target = $region20
        $region19: #{tpu_custom_call.1} parent=11 // pred_region
          %s188 = ssub.s32 256, 256
          %189 = vsyncadd [#allocation6], %s188
          %s190 = sshll.u32 [#allocation7], 4
          %s191 = int_to_ptr.vmem [resolvable:$true] %s190
          %196 = dma.hbm_to_vmem [thread:$0]  %s2, 256, %s191, [#allocation6], 64, 64, 4
        $region20: #{tpu_custom_call.1} parent=11 // pred_fallthru
          _
      $region12: #{tpu_custom_call.1} parent=5 // pred_fallthru
        _
      %p197 = scmp.lt.s32.totalorder %s18, 4
      // Predicated region
      $region21: #{tpu_custom_call.1} parent=5 // pred_check
        %p198 = pneg %p197
      $region22: #{tpu_custom_call.1} parent=5 // pred_check_branch
        %200 = sbr.rel (%p198) target = $region24
      $region23: #{tpu_custom_call.1} parent=5 // pred_region
        // Predicated region
        $region25: #{tpu_custom_call.1} parent=23 // pred_check
          %p201 = pneg %p52
        $region26: #{tpu_custom_call.1} parent=23 // pred_check_branch
          %203 = sbr.rel (%p201) target = $region28
        $region27: #{tpu_custom_call.1} parent=23 // pred_region
          %s204 = sand.u32 %s42, 1
          %s205 = scalar_lea.sflag [#allocation3], %s204
          %s206 = sand.u32 %s42, 1
          %s207 = smul.addr %s206, 16
          %s208 = scalar_lea.vmem [#allocation2], %s207
          %s209 = smul.u32 2, %s26
          %s211 = ssub.s32 256, 256
          %212 = vsyncadd %s205, %s211
          %s213 = smul.addr %s25, 2
          %s214 = sadd.s32 %s209, %s213
          %s215 = smul.addr %s214, 128
          %s216 = scalar_lea.hbm %s0, %s215
          %s217 = sshll.u32 %s208, 4
          %s218 = int_to_ptr.vmem [resolvable:$true] %s217
          %223 = dma.hbm_to_vmem [thread:$0]  %s216, 256, %s218, %s205, 128, 128, 8
        $region28: #{tpu_custom_call.1} parent=23 // pred_fallthru
          _
      $region24: #{tpu_custom_call.1} parent=5 // pred_fallthru
        _
      %p224 = scmp.le.s32.totalorder 1, %s18
      %p225 = scmp.lt.s32.totalorder %s18, 5
      %p226 = pnand %p224, %p225
      %p227 = pneg %p226
      // Predicated region
      $region29: #{tpu_custom_call.1} parent=5 // pred_check
        _
      $region30: #{tpu_custom_call.1} parent=5 // pred_check_branch
        %229 = sbr.rel (%p226) target = $region32
      $region31: #{tpu_custom_call.1} parent=5 // pred_region
        %s230 = ssub.s32 %s18, 1
        %s231 = sand.u32 %s45, 1
        %s232 = scalar_lea.sflag [#allocation3], %s231
        %s233 = sand.u32 %s45, 1
        %s234 = smul.addr %s233, 16
        %s235 = scalar_lea.vmem [#allocation2], %s234
        // Predicated region
        $region33: #{tpu_custom_call.1} parent=31 // pred_check
          %p236 = pneg %p58
        $region34: #{tpu_custom_call.1} parent=31 // pred_check_branch
          %238 = sbr.rel (%p236) target = $region36
        $region35: #{tpu_custom_call.1} parent=31 // pred_region
          %239 = dma.done %s232, 256
        $region36: #{tpu_custom_call.1} parent=31 // pred_fallthru
          _
        // Predicated region
        $region37: #{tpu_custom_call.1} parent=31 // pred_check
          %p240 = pneg %p79
        $region38: #{tpu_custom_call.1} parent=31 // pred_check_branch
          %242 = sbr.rel (%p240) target = $region40
        $region39: #{tpu_custom_call.1} parent=31 // pred_region
          %243 = dma.done [#allocation6], 256
        $region40: #{tpu_custom_call.1} parent=31 // pred_fallthru
          _
        // Predicated region
        $region41: #{tpu_custom_call.1} parent=31 // pred_check
          %p244 = pneg %p100
        $region42: #{tpu_custom_call.1} parent=31 // pred_check_branch
          %246 = sbr.rel (%p244) target = $region44
        $region43: #{tpu_custom_call.1} parent=31 // pred_region
          %247 = dma.done [#allocation6], 256
        $region44: #{tpu_custom_call.1} parent=31 // pred_fallthru
          _
        %s248 = sand.u32 %s45, 1
        %s249 = scalar_lea.sflag [#allocation3], %s248
        %s250 = sand.u32 %s45, 1
        %s251 = smul.addr %s250, 16
        %s252 = scalar_lea.vmem [#allocation2], %s251
        %p253 = pneg %p58
        %p254 = pneg %p55
        %p255 = pneg %p79
        %p256 = pneg %p76
        %p257 = pneg %p100
        %p258 = pneg %p97
        %p259 = pneg %p128
        %p260 = pneg %p125
        %p261 = scmp.lt.s32.totalorder %s27, 3
        %s262 = scalar_select %p261, %s27, 3
        %p263 = scmp.lt.s32.totalorder %s28, 0
        %s264 = scalar_select %p263, %s28, 0
        %s265 = smul.addr %s262, 4
        %s266 = sadd.s32 %s264, %s265
        %s267 = smul.addr %s266, 4
        %s268 = scalar_lea.vmem %s3, %s267
        %p269 = pneg %p156
        %p270 = pneg %p153
        %s271 = sand.u32 %s143, 1
        %s272 = scalar_lea.sflag [#allocation4], %s271
        %s273 = sand.u32 %s143, 1
        %s274 = smul.addr %s273, 8
        %s275 = scalar_lea.vmem [#allocation8], %s274
        %s276 = smul.u32 2, %s28
        %p277 = scmp.lt.s32.totalorder %s27, 3
        %s278 = scalar_select %p277, %s27, 3
        %p279 = scmp.lt.s32.totalorder %s28, 0
        %s280 = scalar_select %p279, %s28, 0
        %s281 = smul.addr %s278, 4
        %s282 = sadd.s32 %s280, %s281
        %s283 = smul.addr %s282, 4
        %s284 = scalar_lea.vmem %s3, %s283
        %s285 = smul.u32 2, %s28
        %v287 = vld [vmem:[%s235] sm:$0xff]
        %v288 = vld [vmem:[%s235 + $0x8] sm:$0xff]
        %v289 = vpack.c.bf16 %v288, %v287
        %v290 = vld [vmem:[#allocation5] sm:$0xf]
        %v291 = vld [vmem:[#allocation5 + $0x4] sm:$0xf]
        %v292 = vld [vmem:[#allocation5 + $0x8] sm:$0xf]
        %v293 = vld [vmem:[#allocation5 + $0xc] sm:$0xf]
        %v298 = vunpack.c.l.b16 %v290
        %v299 = vunpack.c.l.b16 %v291
        %v300 = vunpack.c.l.b16 %v292
        %v301 = vunpack.c.l.b16 %v293
        %v302 = vpack.c.b16 %v299, %v298
        %v303 = vpack.c.b16 %v301, %v300
        %vm306 = vcmask 261120
        %v308 = vsel %vm306, %v289, 0
        %310 = vmatprep.subr.bf16.mxu0 0
        %311 = vmatpush1.bf16.msra.mxu0 0
        %312 = vmatprep.subr.bf16.mxu0 0
        %313 = vmatpush1.bf16.msra.mxu0 0
        %314 = vmatprep.subr.bf16.mxu0 0
        %315 = vmatpush1.bf16.msra.mxu0 0
        %316 = vmatprep.subr.bf16.mxu0 0
        %317 = vmatpush1.bf16.msra.mxu0 0
        %318 = vmatprep.subr.bf16.mxu0 0
        %319 = vmatpush1.bf16.msra.mxu0 0
        %320 = vmatprep.subr.bf16.mxu0 0
        %321 = vmatpush1.bf16.msra.mxu0 0
        %322 = vmatprep.subr.bf16.mxu0 0
        %323 = vmatpush1.bf16.msra.mxu0 %v303
        %324 = vmatprep.subr.bf16.mxu0 0
        %325 = vmatpush1.bf16.msra.mxu0 %v302
        %326 = vmatprep.subr.bf16.mxu0 0
        %327 = vmatpush2.bf16.msra.mxu0 0
        %328 = vmatprep.subr.bf16.mxu0 0
        %329 = vmatpush2.bf16.msra.mxu0 0
        %330 = vmatprep.subr.bf16.mxu0 0
        %331 = vmatpush2.bf16.msra.mxu0 0
        %332 = vmatprep.subr.bf16.mxu0 0
        %333 = vmatpush2.bf16.msra.mxu0 0
        %334 = vmatprep.subr.bf16.mxu0 0
        %335 = vmatpush2.bf16.msra.mxu0 0
        %336 = vmatprep.subr.bf16.mxu0 0
        %337 = vmatpush2.bf16.msra.mxu0 0
        %338 = vmatprep.subr.bf16.mxu0 0
        %339 = vmatpush2.bf16.msra.mxu0 0
        %340 = vmatprep.subr.bf16.mxu0 0
        %341 = vmatpush2.bf16.msra.mxu0 0
        %342 = vmatprep.mubr.bf16.mxu0 0
        %343 = vmatmul.mubr.bf16.gmra.mxu0 %v308
        %v344 = vpop.f32.mrf.mxu0
        %v345 = vadd.f32 0.0, %v344
        %v346 = vpop.f32.mrf.mxu0
        %v347 = vpop.f32.mrf.mxu0
        %v348 = vadd.f32 0.0, %v347
        %v349 = vpop.f32.mrf.mxu0
        %350 = vdwg.mxu0
        %v351 = vld [vmem:[#allocation7] sm:$0xf]
        %v352 = vld [vmem:[#allocation7 + $0x4] sm:$0xf]
        %v353 = vld [vmem:[#allocation7 + $0x8] sm:$0xf]
        %v354 = vld [vmem:[#allocation7 + $0xc] sm:$0xf]
        %v359 = vunpack.c.l.b16 %v351
        %v360 = vunpack.c.l.b16 %v352
        %v361 = vunpack.c.l.b16 %v353
        %v362 = vunpack.c.l.b16 %v354
        %v363 = vpack.c.b16 %v360, %v359
        %v364 = vpack.c.b16 %v362, %v361
        %367 = vmatprep.subr.bf16.mxu0 0
        %368 = vmatpush1.bf16.msra.mxu0 0
        %369 = vmatprep.subr.bf16.mxu0 0
        %370 = vmatpush1.bf16.msra.mxu0 0
        %371 = vmatprep.subr.bf16.mxu0 0
        %372 = vmatpush1.bf16.msra.mxu0 0
        %373 = vmatprep.subr.bf16.mxu0 0
        %374 = vmatpush1.bf16.msra.mxu0 0
        %375 = vmatprep.subr.bf16.mxu0 0
        %376 = vmatpush1.bf16.msra.mxu0 0
        %377 = vmatprep.subr.bf16.mxu0 0
        %378 = vmatpush1.bf16.msra.mxu0 0
        %379 = vmatprep.subr.bf16.mxu0 0
        %380 = vmatpush1.bf16.msra.mxu0 %v364
        %381 = vmatprep.subr.bf16.mxu0 0
        %382 = vmatpush1.bf16.msra.mxu0 %v363
        %383 = vmatprep.subr.bf16.mxu0 0
        %384 = vmatpush2.bf16.msra.mxu0 0
        %385 = vmatprep.subr.bf16.mxu0 0
        %386 = vmatpush2.bf16.msra.mxu0 0
        %387 = vmatprep.subr.bf16.mxu0 0
        %388 = vmatpush2.bf16.msra.mxu0 0
        %389 = vmatprep.subr.bf16.mxu0 0
        %390 = vmatpush2.bf16.msra.mxu0 0
        %391 = vmatprep.subr.bf16.mxu0 0
        %392 = vmatpush2.bf16.msra.mxu0 0
        %393 = vmatprep.subr.bf16.mxu0 0
        %394 = vmatpush2.bf16.msra.mxu0 0
        %395 = vmatprep.subr.bf16.mxu0 0
        %396 = vmatpush2.bf16.msra.mxu0 0
        %397 = vmatprep.subr.bf16.mxu0 0
        %398 = vmatpush2.bf16.msra.mxu0 0
        %399 = vmatprep.mubr.bf16.mxu0 0
        %400 = vmatmul.mubr.bf16.gmra.mxu0 %v308
        %v401 = vpop.f32.mrf.mxu0
        %v402 = vadd.f32 0.0, %v401
        %v403 = vpop.f32.mrf.mxu0
        %v404 = vpop.f32.mrf.mxu0
        %v405 = vadd.f32 0.0, %v404
        %v406 = vpop.f32.mrf.mxu0
        %407 = vdwg.mxu0
        %v408 = vpack.c.bf16 %v348, %v345
        %409 = vxpose.xlu0.c.b16.start [1/8] %v408, 128
        %410 = vxpose.xlu0.c.b16.cont [2/8] 0, 128
        %411 = vxpose.xlu0.c.b16.cont [3/8] 0, 128
        %412 = vxpose.xlu0.c.b16.cont [4/8] 0, 128
        %413 = vxpose.xlu0.c.b16.cont [5/8] 0, 128
        %414 = vxpose.xlu0.c.b16.cont [6/8] 0, 128
        %415 = vxpose.xlu0.c.b16.cont [7/8] 0, 128
        %416 = vxpose.xlu0.c.b16.end [8/8] 0, 128
        %v417 = vpop.trf.xlu0
        %v418 = vpop.trf.xlu0
        %v419 = vpop.trf.xlu0
        %v420 = vpop.trf.xlu0
        %v421 = vpop.trf.xlu0
        %v422 = vpop.trf.xlu0
        %v423 = vpop.trf.xlu0
        %v424 = vpop.trf.xlu0
        %v427 = vunpack.c.l.b16 %v417
        %v428 = vunpack.c.h.b16 %v417
        %v429 = vunpack.c.l.b16 %v418
        %v430 = vunpack.c.h.b16 %v418
        %v431 = vpack.c.b16 %v427, %v427
        %v432 = vpack.c.b16 %v428, %v428
        %v433 = vpack.c.b16 %v429, %v429
        %v434 = vpack.c.b16 %v430, %v430
        %vm439 = vcmask 125952
        %440 = vst.msk [vmem:[%s284] sm:$0xf] %vm439, %v431
        %441 = vst.msk [vmem:[%s284 + $0x4] sm:$0xf] %vm439, %v432
        %442 = vst.msk [vmem:[%s284 + $0x8] sm:$0xf] %vm439, %v433
        %443 = vst.msk [vmem:[%s284 + $0xc] sm:$0xf] %vm439, %v434
        %v444 = vpack.c.bf16 %v405, %v402
        %v446 = vunpack.c.l.b16 %v444
        %v447 = vunpack.c.h.b16 %v444
        %v448 = vpack.c.b16 %v446, %v446
        %v449 = vpack.c.b16 %v447, %v447
        %vm452 = vcmask 257024
        %453 = vst.msk [vmem:[%s275] sm:$0xf] %vm452, %v448
        %454 = vst.msk [vmem:[%s275 + $0x4] sm:$0xf] %vm452, %v449
        %p455 = scmp.lt.s32.totalorder %s27, 3
        %s456 = scalar_select %p455, %s27, 3
        %p457 = scmp.lt.s32.totalorder %s28, 0
        %s458 = scalar_select %p457, %s28, 0
        %s459 = smul.addr %s456, 4
        %s460 = sadd.s32 %s458, %s459
        %s461 = smul.addr %s460, 4
        %s462 = scalar_lea.vmem %s3, %s461
        %s463 = sand.u32 %s143, 1
        %s464 = scalar_lea.sflag [#allocation4], %s463
        %s465 = sand.u32 %s143, 1
        %s466 = smul.addr %s465, 8
        %s467 = scalar_lea.vmem [#allocation8], %s466
        // Predicated region
        $region45: #{tpu_custom_call.1} parent=31 // pred_check
          %p468 = pneg %p125
        $region46: #{tpu_custom_call.1} parent=31 // pred_check_branch
          %470 = sbr.rel (%p468) target = $region48
        $region47: #{tpu_custom_call.1} parent=31 // pred_region
          _
        $region48: #{tpu_custom_call.1} parent=31 // pred_fallthru
          _
        // Predicated region
        $region49: #{tpu_custom_call.1} parent=31 // pred_check
          %p471 = pneg %p153
        $region50: #{tpu_custom_call.1} parent=31 // pred_check_branch
          %473 = sbr.rel (%p471) target = $region52
        $region51: #{tpu_custom_call.1} parent=31 // pred_region
          %s474 = smul.u32 2, %s28
          %s476 = ssub.s32 128, 128
          %477 = vsyncadd %s464, %s476
          %s478 = smul.addr %s27, 2
          %s479 = sadd.s32 %s474, %s478
          %s480 = smul.addr %s479, 64
          %s481 = scalar_lea.hbm %s4, %s480
          %s482 = sshll.u32 %s467, 4
          %s483 = int_to_ptr.vmem [resolvable:$true] %s482
          %488 = dma.vmem_to_hbm [thread:$0]  %s483, 128, %s481, %s464, 64, 64, 4
        $region52: #{tpu_custom_call.1} parent=31 // pred_fallthru
          _
      $region32: #{tpu_custom_call.1} parent=5 // pred_fallthru
        _
      %p489 = scmp.le.s32.totalorder 2, %s18
      // Predicated region
      $region53: #{tpu_custom_call.1} parent=5 // pred_check
        %p490 = pneg %p489
      $region54: #{tpu_custom_call.1} parent=5 // pred_check_branch
        %492 = sbr.rel (%p490) target = $region56
      $region55: #{tpu_custom_call.1} parent=5 // pred_region
        %s493 = ssub.s32 %s18, 2
        // Predicated region
        $region57: #{tpu_custom_call.1} parent=55 // pred_check
          %p494 = pneg %p131
        $region58: #{tpu_custom_call.1} parent=55 // pred_check_branch
          %496 = sbr.rel (%p494) target = $region60
        $region59: #{tpu_custom_call.1} parent=55 // pred_region
          %p497 = scmp.lt.s32.totalorder %s29, 3
          %s498 = scalar_select %p497, %s29, 3
          %p499 = scmp.lt.s32.totalorder %s30, 0
          %s500 = scalar_select %p499, %s30, 0
          %s501 = smul.addr %s498, 4
          %s502 = sadd.s32 %s500, %s501
          %s503 = smul.addr %s502, 4
          %s504 = scalar_lea.vmem %s3, %s503
        $region60: #{tpu_custom_call.1} parent=55 // pred_fallthru
          _
        // Predicated region
        $region61: #{tpu_custom_call.1} parent=55 // pred_check
          %p505 = pneg %p159
        $region62: #{tpu_custom_call.1} parent=55 // pred_check_branch
          %507 = sbr.rel (%p505) target = $region64
        $region63: #{tpu_custom_call.1} parent=55 // pred_region
          %s508 = sand.u32 %s144, 1
          %s509 = scalar_lea.sflag [#allocation4], %s508
          %s510 = sand.u32 %s144, 1
          %s511 = smul.addr %s510, 8
          %s512 = scalar_lea.vmem [#allocation8], %s511
          %513 = dma.done %s509, 128
        $region64: #{tpu_custom_call.1} parent=55 // pred_fallthru
          _
      $region56: #{tpu_custom_call.1} parent=5 // pred_fallthru
        _
    $region6: #{tpu_custom_call.1} parent=1 // loop_footer
      %s22 = sadd.s32 1, %s18
    $region7: #{tpu_custom_call.1} parent=1 // loop_footer_branch
      %17 = sbr.rel target = $region3
    $region8: #{tpu_custom_call.1} parent=1 // loop_exit
      _
    %514 = vsyncpa [#allocation3], 1
    %s515 = scalar_lea.sflag [#allocation3], 1
    %516 = vsyncpa %s515, 1
    %517 = vsyncpa [#allocation6], 1
    %518 = vsyncpa [#allocation4], 1
    %s519 = scalar_lea.sflag [#allocation4], 1
    %520 = vsyncpa %s519, 1

</llo_original>
